<compile_context>
chip_gen: v5e
topology: v5e:2x2
jax: 0.10.0
libtpu: 0.0.40
codegen_flags: <defaults>
</compile_context>

<pallas_src>
import functools

import jax
import jax.numpy as jnp
from jax.experimental import pallas as pl
from jax.experimental.pallas import tpu as pltpu

_TILE_TARGET_VMEM_BYTES = 8 * 1024 * 1024   # per buffer set (double-buffered x2)
_VMEM_LIMIT_CACHE = [None]


# ----------------------------------------------------------------------------
# small helpers
# ----------------------------------------------------------------------------
def _round_up(x, m):
    return ((x + m - 1) // m) * m


def _sublane(dtype):
    # dtype-native sublane multiple: 8 for 32-bit, 16 for bf16/f16, 32 for int8.
    return {1: 32, 2: 16}.get(jnp.dtype(dtype).itemsize, 8)


def _block_row_bytes(ncols, dtype):
    # VMEM blocks are lane-padded to multiples of 128 in the last dim, so a
    # (tn, 1) f32/int32 block still costs 512 B per row of VMEM.
    return _round_up(int(ncols), 128) * jnp.dtype(dtype).itemsize


def _vmem_limit_bytes():
    if _VMEM_LIMIT_CACHE[0] is None:
        limit = 32 * 1024 * 1024                      # safe fallback on any gen
        try:
            cap = int(pltpu.get_tpu_info().vmem_capacity_bytes)
            # v5e/v6e: 128 MiB physical -> allow bigger tiles; v7x: 64 MiB/TC.
            limit = (96 * 1024 * 1024 if cap > 64 * 1024 * 1024
                     else 48 * 1024 * 1024)
        except Exception:
            pass
        _VMEM_LIMIT_CACHE[0] = limit
    return _VMEM_LIMIT_CACHE[0]


def _compiler_params():
    return pltpu.CompilerParams(dimension_semantics=("parallel",),
                                vmem_limit_bytes=_vmem_limit_bytes())


def _pick_tile_n(n, vmem_bytes_per_row, sublane, target_bytes):
    rows = max(sublane, int(target_bytes) // max(1, int(vmem_bytes_per_row)))
    if n > sublane:
        # Keep >= 2 row tiles whenever possible so 'parallel' grid sharding can
        # use both TensorCores on megacore parts (v7x).
        rows = min(rows, _round_up(-(-n // 2), sublane))
    rows = _round_up(rows, sublane)
    if rows >= n:
        return n            # single full-extent block: always layout-legal
    return rows


# ----------------------------------------------------------------------------
# Pallas kernels (row-tiled; full class dim per block)
# ----------------------------------------------------------------------------
def _row_index(tile_rows, nrows_in_block):
    return (pl.program_id(0) * tile_rows
            + jax.lax.broadcasted_iota(jnp.int32, (nrows_in_block, 1), 0))


def _softmax_ce_kernel(n_rows, tile_rows, logit_ref, label_ref, out_ref):
    """loss_i = logsumexp(x_i) - x_i[label_i]; 0 if label < 0 or row >= N."""
    x = logit_ref[...].astype(jnp.float32)                      # (T, C)
    lab = label_ref[...]                                        # (T, 1) int32
    m = jnp.max(x, axis=-1, keepdims=True)
    lse = jnp.log(jnp.sum(jnp.exp(x - m), axis=-1, keepdims=True)) + m
    col = jax.lax.broadcasted_iota(jnp.int32, x.shape, 1)
    picked = jnp.sum(jnp.where(col == lab, x, 0.0), axis=-1, keepdims=True)
    row = _row_index(tile_rows, x.shape[0])
    valid = (row < n_rows) & (lab >= 0)    # ignore_index + ragged-tail rows
    out_ref[...] = jnp.where(valid, lse - picked, 0.0)


def _bce_rowsum_int_kernel(n_rows, tile_rows, has_weight,
                           logit_ref, label_ref, *rest):
    """Per-row sum over classes of stable BCE-with-logits (int labels)."""
    if has_weight:
        w_ref, out_ref = rest
    else:
        (out_ref,) = rest
    x = logit_ref[...].astype(jnp.float32)
    lab = label_ref[...]
    base = jnp.maximum(x, 0.0) + jnp.log1p(jnp.exp(-jnp.abs(x)))
    col = jax.lax.broadcasted_iota(jnp.int32, x.shape, 1)
    picked = jnp.sum(jnp.where((lab >= 1) & (col == lab - 1), x, 0.0),
                     axis=-1, keepdims=True)
    rowsum = jnp.sum(base, axis=-1, keepdims=True) - picked
    if has_weight:
        rowsum = rowsum * w_ref[...].astype(jnp.float32)
    row = _row_index(tile_rows, x.shape[0])
    out_ref[...] = jnp.where(row < n_rows, rowsum, 0.0)


def _bce_elem_int_kernel(n_rows, tile_rows, has_weight,
                         logit_ref, label_ref, *rest):
    """Elementwise stable BCE-with-logits (int labels), weight fused."""
    if has_weight:
        w_ref, out_ref = rest
    else:
        (out_ref,) = rest
    x = logit_ref[...].astype(jnp.float32)
    lab = label_ref[...]
    col = jax.lax.broadcasted_iota(jnp.int32, x.shape, 1)
    elem = (jnp.maximum(x, 0.0) + jnp.log1p(jnp.exp(-jnp.abs(x)))
            - jnp.where((lab >= 1) & (col == lab - 1), x, 0.0))
    if has_weight:
        elem = elem * w_ref[...].astype(jnp.float32)
    row = _row_index(tile_rows, x.shape[0])
    out_ref[...] = jnp.where(row < n_rows, elem, 0.0).astype(out_ref.dtype)


def _bce_rowsum_dense_kernel(n_rows, tile_rows, has_weight,
                             logit_ref, target_ref, *rest):
    """Per-row sum over classes of stable BCE-with-logits (dense targets)."""
    if has_weight:
        w_ref, out_ref = rest
    else:
        (out_ref,) = rest
    x = logit_ref[...].astype(jnp.float32)
    y = target_ref[...].astype(jnp.float32)
    elem = jnp.maximum(x, 0.0) - x * y + jnp.log1p(jnp.exp(-jnp.abs(x)))
    if has_weight:
        elem = elem * w_ref[...].astype(jnp.float32)   # (T,1) or (T,C) weight
    rowsum = jnp.sum(elem, axis=-1, keepdims=True)
    row = _row_index(tile_rows, x.shape[0])
    out_ref[...] = jnp.where(row < n_rows, rowsum, 0.0)


def _bce_elem_dense_kernel(n_rows, tile_rows, has_weight,
                           logit_ref, target_ref, *rest):
    """Elementwise stable BCE-with-logits (dense targets), weight fused."""
    if has_weight:
        w_ref, out_ref = rest
    else:
        (out_ref,) = rest
    x = logit_ref[...].astype(jnp.float32)
    y = target_ref[...].astype(jnp.float32)
    elem = jnp.maximum(x, 0.0) - x * y + jnp.log1p(jnp.exp(-jnp.abs(x)))
    if has_weight:
        elem = elem * w_ref[...].astype(jnp.float32)
    row = _row_index(tile_rows, x.shape[0])
    out_ref[...] = jnp.where(row < n_rows, elem, 0.0).astype(out_ref.dtype)


# ----------------------------------------------------------------------------
# launch helper
# ----------------------------------------------------------------------------
def _launch_rowwise(kernel_builder, pred, extras, out_cols, out_dtype,
                    flops_per_elem, trans_per_elem, tile_n=None):
    """Row-tiled launch: grid over row tiles, full class dim per block.

    kernel_builder(n_rows, tile_rows) must return a kernel taking
    (pred_ref, *extra_refs, out_ref).  extras are (N, k) arrays, k in {1, C}.
    """
    n, c = pred.shape
    sub = _sublane(pred.dtype)

    vmem_per_row = _block_row_bytes(c, pred.dtype)
    hbm_per_row = c * pred.dtype.itemsize
    for op in extras:
        k = op.shape[1]
        vmem_per_row += _block_row_bytes(k, op.dtype)
        hbm_per_row += k * op.dtype.itemsize
    vmem_per_row += _block_row_bytes(out_cols, out_dtype)
    hbm_per_row += out_cols * jnp.dtype(out_dtype).itemsize

    if tile_n is not None:
        tn = int(tile_n)
        tn = n if tn >= n else max(sub, _round_up(tn, sub))
    else:
        tn = _pick_tile_n(n, vmem_per_row, sub, _TILE_TARGET_VMEM_BYTES)
    num_tiles = pl.cdiv(n, tn)

    in_specs = [pl.BlockSpec((tn, c), lambda i: (i, 0))]
    for op in extras:
        in_specs.append(pl.BlockSpec((tn, op.shape[1]), lambda i: (i, 0)))

    cost = pl.CostEstimate(
        flops=int(flops_per_elem) * n * c,
        transcendentals=int(trans_per_elem) * n * c,
        bytes_accessed=int(hbm_per_row) * n)

    return pl.pallas_call(
        kernel_builder(n, tn),
        out_shape=jax.ShapeDtypeStruct((n, out_cols), out_dtype),
        grid=(num_tiles,),
        in_specs=in_specs,
        out_specs=pl.BlockSpec((tn, out_cols), lambda i: (i, 0)),
        compiler_params=_compiler_params(),
        cost_estimate=cost,
    )(pred, *extras)


# ----------------------------------------------------------------------------
# Pallas wrappers
# ----------------------------------------------------------------------------
def softmax_cross_entropy_per_sample(pred, label, tile_n=None):
    """pred: (N, C), label: (N,) int -> (N,) f32 per-sample CE loss."""
    n, _ = pred.shape
    lab = label.astype(jnp.int32).reshape(n, 1)
    out = _launch_rowwise(
        lambda nn, tr: functools.partial(_softmax_ce_kernel, nn, tr),
        pred, [lab], out_cols=1, out_dtype=jnp.float32,
        flops_per_elem=5, trans_per_elem=1, tile_n=tile_n)
    return out[:, 0]


def bce_rowsum_from_int_label(pred, label, weight=None, tile_n=None):
    """(N, C) logits, (N,) int label (0=bg, k>=1 -> ch k-1) -> (N,) row sums."""
    n, _ = pred.shape
    lab = label.astype(jnp.int32).reshape(n, 1)
    extras = [lab]
    has_w = weight is not None
    if has_w:
        extras.append(jnp.asarray(weight).reshape(n, 1).astype(jnp.float32))
    out = _launch_rowwise(
        lambda nn, tr: functools.partial(_bce_rowsum_int_kernel, nn, tr, has_w),
        pred, extras, out_cols=1, out_dtype=jnp.float32,
        flops_per_elem=5, trans_per_elem=2, tile_n=tile_n)
    return out[:, 0]


def bce_elementwise_from_int_label(pred, label, weight=None, out_dtype=None,
                                   tile_n=None):
    """(N, C) logits, (N,) int label -> (N, C) elementwise BCE (weight fused)."""
    n, c = pred.shape
    od = pred.dtype if out_dtype is None else out_dtype
    lab = label.astype(jnp.int32).reshape(n, 1)
    extras = [lab]
    has_w = weight is not None
    if has_w:
        extras.append(jnp.asarray(weight).reshape(n, 1).astype(jnp.float32))
    return _launch_rowwise(
        lambda nn, tr: functools.partial(_bce_elem_int_kernel, nn, tr, has_w),
        pred, extras, out_cols=c, out_dtype=od,
        flops_per_elem=5, trans_per_elem=2, tile_n=tile_n)


def _as_weight_block(weight, n, c):
    if weight is None:
        return None
    w = jnp.asarray(weight)
    if w.ndim == 1 or (w.ndim == 2 and w.shape[1] == 1):
        return w.reshape(n, 1).astype(jnp.float32)       # per-sample weight
    assert w.shape == (n, c), f"unsupported weight shape {w.shape}"
    return w                                             # dense weight


def bce_rowsum_dense(pred, target, weight=None, tile_n=None):
    """(N, C) logits, (N, C) targets -> (N,) row sums of BCE (weight fused)."""
    n, c = pred.shape
    if target.dtype == jnp.bool_:
        target = target.astype(jnp.float32)
    extras = [target]
    wb = _as_weight_block(weight, n, c)
    has_w = wb is not None
    if has_w:
        extras.append(wb)
    out = _launch_rowwise(
        lambda nn, tr: functools.partial(_bce_rowsum_dense_kernel, nn, tr, has_w),
        pred, extras, out_cols=1, out_dtype=jnp.float32,
        flops_per_elem=5, trans_per_elem=2, tile_n=tile_n)
    return out[:, 0]


def bce_elementwise_dense(pred, target, weight=None, out_dtype=None, tile_n=None):
    """(N, C) logits, (N, C) targets -> (N, C) elementwise BCE (weight fused)."""
    n, c = pred.shape
    od = pred.dtype if out_dtype is None else out_dtype
    if target.dtype == jnp.bool_:
        target = target.astype(jnp.float32)
    extras = [target]
    wb = _as_weight_block(weight, n, c)
    has_w = wb is not None
    if has_w:
        extras.append(wb)
    return _launch_rowwise(
        lambda nn, tr: functools.partial(_bce_elem_dense_kernel, nn, tr, has_w),
        pred, extras, out_cols=c, out_dtype=od,
        flops_per_elem=5, trans_per_elem=2, tile_n=tile_n)


# ----------------------------------------------------------------------------
# mmdet glue (weight_reduce_loss & friends) -- tiny tensors, plain JAX
# ----------------------------------------------------------------------------
def _weight_reduce_loss(loss, weight=None, reduction="mean", avg_factor=None):
    if weight is not None:
        loss = loss * weight
    if avg_factor is None:
        if reduction == "mean":
            loss = loss.mean()
        elif reduction == "sum":
            loss = loss.sum()
        # 'none': leave as-is
    else:
        if reduction == "mean":
            loss = loss.sum() / avg_factor
        elif reduction != "none":
            raise ValueError('avg_factor can not be used with reduction="sum"')
    return loss


def cross_entropy(pred, label, weight=None, reduction="mean", avg_factor=None):
    # NOTE: matches mmdet exactly -- F.cross_entropy(reduction='none') then
    # weight_reduce_loss, so 'mean' divides by ALL rows including ignored
    # (label < 0) rows, whose per-sample loss is 0.
    loss = softmax_cross_entropy_per_sample(pred, label)       # (N,) f32
    if weight is not None:
        weight = jnp.asarray(weight).astype(jnp.float32)
    return _weight_reduce_loss(loss, weight=weight, reduction=reduction,
                               avg_factor=avg_factor)


def binary_cross_entropy(pred, label, weight=None, reduction="mean",
                         avg_factor=None):
    n, c = pred.shape
    dense = (pred.ndim == label.ndim)

    if reduction == "none":
        # Elementwise loss with the (per-sample or dense) weight fused in-kernel.
        if dense:
            return bce_elementwise_dense(pred, label, weight=weight)
        return bce_elementwise_from_int_label(pred, label, weight=weight)

    # 'mean' / 'sum': fused per-row class sum in-kernel -> only an (N, 1)
    # column ever leaves the kernel; nothing (N, C)-sized is written to HBM.
    if dense:
        row = bce_rowsum_dense(pred, label, weight=weight)       # (N,)
    else:
        row = bce_rowsum_from_int_label(pred, label, weight=weight)
    total = row.sum()
    if avg_factor is not None:
        if reduction == "mean":
            return total / avg_factor
        raise ValueError('avg_factor can not be used with reduction="sum"')
    if reduction == "mean":
        return total / (n * c)
    return total  # 'sum'


def mask_cross_entropy(pred, target, label, reduction="mean", avg_factor=None):
    assert reduction == "mean" and avg_factor is None
    num_rois = pred.shape[0]
    # TODO(synk): the per-ROI class-channel gather is done in XLA; it could be
    # fused with a scalar-prefetch-indexed BlockSpec if it ever dominates.
    pred_slice = pred[jnp.arange(num_rois), label.astype(jnp.int32)]
    x = pred_slice.reshape(num_rois, -1)
    t = jnp.asarray(target).reshape(num_rois, -1)
    row = bce_rowsum_dense(x, t)                   # fused BCE per-ROI sums
    return (row.sum() / x.size)[None]


class CrossEntropyLoss:
    def __init__(self, use_sigmoid=False, use_mask=False, reduction="mean",
                 loss_weight=1.0):
        assert use_sigmoid is False or use_mask is False
        self.use_sigmoid = use_sigmoid
        self.use_mask = use_mask
        self.reduction = reduction
        self.loss_weight = loss_weight
        if self.use_sigmoid:
            self.cls_criterion = binary_cross_entropy
        elif self.use_mask:
            self.cls_criterion = mask_cross_entropy
        else:
            self.cls_criterion = cross_entropy

    def __call__(self, cls_score, label, weight=None, avg_factor=None,
                 reduction_override=None, **kwargs):
        assert reduction_override in (None, "none", "mean", "sum")
        reduction = reduction_override if reduction_override else self.reduction
        loss_cls = self.loss_weight * self.cls_criterion(
            cls_score, label, weight, reduction=reduction,
            avg_factor=avg_factor, **kwargs)
        return loss_cls


# ----------------------------------------------------------------------------
# Demo / self-check
# ----------------------------------------------------------------------------
if __name__ == "__main__":
    key = jax.random.PRNGKey(0)
    k1, k2, k3, k4, k5, k6, k7, k8 = jax.random.split(key, 8)

    N, C = 10, 32
    cls_score = jax.random.normal(k1, (N, C), dtype=jnp.float32)
    label = jax.random.randint(k2, (N,), 0, C, dtype=jnp.int32)
    sample_weight = jax.random.uniform(k3, (N,), dtype=jnp.float32)

    # --- default path: softmax cross entropy ---
    ce_mod = CrossEntropyLoss(use_sigmoid=False, reduction="mean", loss_weight=1.0)
    loss_mean = ce_mod(cls_score, label)
    loss_weighted = ce_mod(cls_score, label, weight=sample_weight,
                           avg_factor=float(N))
    loss_none = ce_mod(cls_score, label, reduction_override="none")
    jax.block_until_ready((loss_mean, loss_weighted, loss_none))

    lse = jax.nn.logsumexp(cls_score, axis=-1)
    ref_ps = lse - cls_score[jnp.arange(N), label]
    assert jnp.allclose(loss_none, ref_ps, atol=1e-5, rtol=1e-5)
    assert jnp.allclose(loss_mean, ref_ps.mean(), atol=1e-5, rtol=1e-5)
    assert jnp.allclose(loss_weighted, (ref_ps * sample_weight).sum() / N,
                        atol=1e-5, rtol=1e-5)

    # ignore_index (-100) -> zero loss for that row
    label_ig = label.at[3].set(-100)
    loss_ig = ce_mod(cls_score, label_ig, reduction_override="none")
    ref_ig = jnp.where(label_ig >= 0,
                       lse - cls_score[jnp.arange(N), jnp.maximum(label_ig, 0)],
                       0.0)
    assert jnp.allclose(loss_ig, ref_ig, atol=1e-5, rtol=1e-5)

    # ragged multi-tile grid (tile_n=8, N=10 -> 2 tiles, partial last block)
    ps_multi = softmax_cross_entropy_per_sample(cls_score, label, tile_n=8)
    assert jnp.allclose(ps_multi, ref_ps, atol=1e-5, rtol=1e-5)

    # bf16 logits stay bf16 on the wire (f32 math inside the kernel)
    ps_bf16 = softmax_cross_entropy_per_sample(cls_score.astype(jnp.bfloat16),
                                               label)
    assert jnp.allclose(ps_bf16, ref_ps, atol=5e-2, rtol=5e-2)

    # --- sigmoid (BCE) path ---
    bce_mod = CrossEntropyLoss(use_sigmoid=True, reduction="mean", loss_weight=1.0)
    bce_label = jax.random.randint(k4, (N,), 0, C + 1, dtype=jnp.int32)

    y_bin = (jax.nn.one_hot(jnp.maximum(bce_label - 1, 0), C, dtype=jnp.float32)
             * (bce_label >= 1).astype(jnp.float32)[:, None])
    ref_elem = (jnp.maximum(cls_score, 0.0) - cls_score * y_bin
                + jnp.log1p(jnp.exp(-jnp.abs(cls_score))))

    bce_mean = bce_mod(cls_score, bce_label)
    bce_none = bce_mod(cls_score, bce_label, reduction_override="none")
    bce_none_w = bce_mod(cls_score, bce_label, weight=sample_weight,
                         reduction_override="none")
    bce_wavg = bce_mod(cls_score, bce_label, weight=sample_weight,
                       avg_factor=12.5)
    jax.block_until_ready((bce_mean, bce_none, bce_none_w, bce_wavg))

    assert jnp.allclose(bce_mean, ref_elem.mean(), atol=1e-5, rtol=1e-5)
    assert jnp.allclose(bce_none, ref_elem, atol=1e-5, rtol=1e-5)
    assert jnp.allclose(bce_none_w, ref_elem * sample_weight[:, None],
                        atol=1e-5, rtol=1e-5)
    assert jnp.allclose(bce_wavg,
                        (ref_elem * sample_weight[:, None]).sum() / 12.5,
                        atol=1e-5, rtol=1e-5)

    # dense (N, C) binary targets path
    dense_t = (jax.random.uniform(k5, (N, C)) > 0.5).astype(jnp.float32)
    bce_dense_mean = bce_mod(cls_score, dense_t)
    bce_dense_none = bce_mod(cls_score, dense_t, reduction_override="none")
    ref_dense = (jnp.maximum(cls_score, 0.0) - cls_score * dense_t
                 + jnp.log1p(jnp.exp(-jnp.abs(cls_score))))
    jax.block_until_ready((bce_dense_mean, bce_dense_none))
    assert jnp.allclose(bce_dense_mean, ref_dense.mean(), atol=1e-5, rtol=1e-5)
    assert jnp.allclose(bce_dense_none, ref_dense, atol=1e-5, rtol=1e-5)

    # --- mask path (use_mask=True) ---
    R, CM, H, W = 4, 3, 8, 8
    mask_pred = jax.random.normal(k6, (R, CM, H, W), dtype=jnp.float32)
    mask_tgt = (jax.random.uniform(k7, (R, H, W)) > 0.5).astype(jnp.float32)
    roi_labels = jax.random.randint(k8, (R,), 0, CM, dtype=jnp.int32)
    mask_mod = CrossEntropyLoss(use_mask=True, reduction="mean", loss_weight=1.0)
    mloss = mask_mod(mask_pred, mask_tgt, weight=roi_labels)
    jax.block_until_ready(mloss)
    ps = mask_pred[jnp.arange(R), roi_labels]
    ref_m = (jnp.maximum(ps, 0.0) - ps * mask_tgt
             + jnp.log1p(jnp.exp(-jnp.abs(ps)))).mean()
    assert mloss.shape == (1,)
    assert jnp.allclose(mloss[0], ref_m, atol=1e-5, rtol=1e-5)

    print("KERNEL_OK")
</pallas_src>

<mosaic_0001>
module attributes {stable_mosaic.version = 11 : i64} {
  func.func @_softmax_ce_kernel(%arg0: i32, %arg1: memref<8x32xf32, #tpu.memory_space<vmem>>, %arg2: memref<8x1xi32, #tpu.memory_space<vmem>>, %arg3: memref<8x1xf32, #tpu.memory_space<vmem>>) attributes {dimension_semantics = [#tpu.dimension_semantics<parallel>], iteration_bounds = array<i64: 2>, scalar_prefetch = 0 : i64, scratch_operands = 0 : i64, tpu.core_type = #tpu.core_type<tc>, window_params = [{transform_indices = @transform_0, window_bounds = array<i64: 8, 32>}, {transform_indices = @transform_1, window_bounds = array<i64: 8, 1>}, {transform_indices = @transform_2, window_bounds = array<i64: 8, 1>}]} {
    %c0 = arith.constant 0 : index
    %c0_0 = arith.constant 0 : index
    %0 = vector.load %arg1[%c0, %c0_0] : memref<8x32xf32, #tpu.memory_space<vmem>>, vector<8x32xf32>
    %c0_1 = arith.constant 0 : index
    %c0_2 = arith.constant 0 : index
    %1 = vector.load %arg2[%c0_1, %c0_2] : memref<8x1xi32, #tpu.memory_space<vmem>>, vector<8x1xi32>
    %cst = arith.constant dense<0xFF800000> : vector<8xf32>
    %2 = vector.multi_reduction <maximumf>, %0, %cst [1] : vector<8x32xf32> to vector<8xf32>
    %3 = vector.shape_cast %2 : vector<8xf32> to vector<8x1xf32>
    %4 = vector.broadcast %3 : vector<8x1xf32> to vector<8x32xf32>
    %5 = arith.subf %0, %4 : vector<8x32xf32>
    %6 = math.exp %5 : vector<8x32xf32>
    %cst_3 = arith.constant dense<0.000000e+00> : vector<8xf32>
    %7 = vector.multi_reduction <add>, %6, %cst_3 [1] : vector<8x32xf32> to vector<8xf32>
    %8 = vector.shape_cast %7 : vector<8xf32> to vector<8x1xf32>
    %9 = math.log %8 : vector<8x1xf32>
    %10 = arith.addf %9, %3 : vector<8x1xf32>
    %11 = tpu.iota {dimensions = array<i32: 1>} : vector<8x32xi32>
    %12 = vector.broadcast %1 : vector<8x1xi32> to vector<8x32xi32>
    %13 = arith.cmpi eq, %11, %12 : vector<8x32xi32>
    %cst_4 = arith.constant 0.000000e+00 : f32
    %14 = vector.broadcast %cst_4 : f32 to vector<8x32xf32>
    %15 = arith.select %13, %0, %14 : vector<8x32xi1>, vector<8x32xf32>
    %cst_5 = arith.constant dense<0.000000e+00> : vector<8xf32>
    %16 = vector.multi_reduction <add>, %15, %cst_5 [1] : vector<8x32xf32> to vector<8xf32>
    %17 = vector.shape_cast %16 : vector<8xf32> to vector<8x1xf32>
    %c8_i32 = arith.constant 8 : i32
    %18 = arith.muli %arg0, %c8_i32 : i32
    %19 = tpu.iota {dimensions = array<i32: 0>} : vector<8x1xi32>
    %20 = vector.broadcast %18 : i32 to vector<8x1xi32>
    %21 = arith.addi %20, %19 : vector<8x1xi32>
    %c10_i32 = arith.constant 10 : i32
    %22 = vector.broadcast %c10_i32 : i32 to vector<8x1xi32>
    %23 = arith.cmpi slt, %21, %22 : vector<8x1xi32>
    %c0_i32 = arith.constant 0 : i32
    %24 = vector.broadcast %c0_i32 : i32 to vector<8x1xi32>
    %25 = arith.cmpi sge, %1, %24 : vector<8x1xi32>
    %26 = arith.andi %23, %25 : vector<8x1xi1>
    %27 = arith.subf %10, %17 : vector<8x1xf32>
    %cst_6 = arith.constant 0.000000e+00 : f32
    %28 = vector.broadcast %cst_6 : f32 to vector<8x1xf32>
    %29 = arith.select %26, %27, %28 : vector<8x1xi1>, vector<8x1xf32>
    %c0_7 = arith.constant 0 : index
    %c0_8 = arith.constant 0 : index
    %30 = vector.load %arg3[%c0_7, %c0_8] : memref<8x1xf32, #tpu.memory_space<vmem>>, vector<8x1xf32>
    tpu.vector_store %arg3[%c0_7, %c0_8], %29 {strides = array<i32>} : memref<8x1xf32, #tpu.memory_space<vmem>>, vector<8x1xf32>,
    return
  }
  func.func @transform_0(%arg0: i32) -> (i32, i32) {
    %c0_i32 = arith.constant 0 : i32
    %c0_i32_0 = arith.constant 0 : i32
    return %arg0, %c0_i32 : i32, i32
  }
  func.func @transform_1(%arg0: i32) -> (i32, i32) {
    %c0_i32 = arith.constant 0 : i32
    %c0_i32_0 = arith.constant 0 : i32
    return %arg0, %c0_i32 : i32, i32
  }
  func.func @transform_2(%arg0: i32) -> (i32, i32) {
    %c0_i32 = arith.constant 0 : i32
    %c0_i32_0 = arith.constant 0 : i32
    return %arg0, %c0_i32 : i32, i32
  }
}

</mosaic_0001>

<llo_original>
// kernel: tpu_custom_call.1
$region0: #{tpu_custom_call.1}
  #allocation0 [shape = 'u32[]', space=smem, size = 0x4, offset = 0x4, fixed_abs, tag = 'smem constant byte address 0x4 - core index']
  #allocation1 [shape = 'u32[72,128]{1,0:T(1,128)}', space=vmem, size = 0x9000, scoped, tag = 'internal scratch']
  %s0 = inlined_call_operand.vmem [shape: f32[10,32], index: 0, kind: input, shape index: {}]
  %s1 = inlined_call_operand.vmem [shape: s32[10,1], index: 1, kind: input, shape index: {}]
  %s2 = inlined_call_operand.vmem [shape: f32[10,1], index: 2, kind: output, shape index: {}]
  %s3 = sld [smem:[#allocation0]]
  $region41: #{tpu_custom_call.1} parent=0
    _
  %s5 = ssub.s32 1, %s3
  %s6 = scalar_select 0, %s5, %s3
  loop: start=0, step=1, limit=4
  $region2: #{tpu_custom_call.1} parent=0 // loop_pre_header
    _
  $region3: #{tpu_custom_call.1} parent=0 // loop_header
    %s8 = sphi 0, %s12
    %p9 = scmp.ge.s32.totalorder %s8, 4
    %s18 = sphi 0, %s20
    %s21 = sphi 0, %s18
    %s22 = sphi 0, %s21
    %s38 = sphi 0, %s22
    %s44 = sphi 0, %s46
    %s47 = sphi 0, %s44
    %s48 = sphi 0, %s47
    %s64 = sphi 0, %s48
    %s70 = sphi 0, %s72
    %s73 = sphi 0, %s70
    %s74 = sphi 0, %s73
    %s90 = sphi 0, %s74
  $region4: #{tpu_custom_call.1} parent=0 // loop_header_branch
    %11 = sbr.rel (%p9) target = $region8
  $region5: #{tpu_custom_call.1} parent=0 // loop_body
    %s13 = ssub.s32 %s8, 1
    %s14 = ssub.s32 %s8, 2
    %s15 = sadd.s32 %s8, 1
    %s16 = ssub.s32 %s8, %s15
    %p17 = scmp.eq.s32.totalorder %s16, 0
    %s19 = sadd.s32 %s18, 1
    %s20 = scalar_select %p17, %s18, %s19
    %p23 = pneg %p17
    %p24 = scmp.eq.s32.totalorder %s8, 1
    %p25 = por %p23, %p24
    %p26 = scmp.ne.s32.totalorder %s18, %s21
    %p27 = scmp.eq.s32.totalorder %s8, 0
    %p28 = por %p26, %p27
    %p29 = scmp.ne.s32.totalorder %s18, %s21
    %p30 = scmp.eq.s32.totalorder %s13, 1
    %p31 = por %p29, %p30
    %p32 = scmp.ne.s32.totalorder %s21, %s22
    %p33 = scmp.eq.s32.totalorder %s13, 0
    %p34 = por %p32, %p33
    %p35 = scmp.ne.s32.totalorder %s21, %s22
    %p36 = scmp.eq.s32.totalorder %s14, 1
    %p37 = por %p35, %p36
    %p39 = scmp.ne.s32.totalorder %s22, %s38
    %p40 = scmp.eq.s32.totalorder %s14, 0
    %p41 = por %p39, %p40
    %s42 = ssub.s32 %s8, %s15
    %p43 = scmp.eq.s32.totalorder %s42, 0
    %s45 = sadd.s32 %s44, 1
    %s46 = scalar_select %p43, %s44, %s45
    %p49 = pneg %p43
    %p50 = scmp.eq.s32.totalorder %s8, 1
    %p51 = por %p49, %p50
    %p52 = scmp.ne.s32.totalorder %s44, %s47
    %p53 = scmp.eq.s32.totalorder %s8, 0
    %p54 = por %p52, %p53
    %p55 = scmp.ne.s32.totalorder %s44, %s47
    %p56 = scmp.eq.s32.totalorder %s13, 1
    %p57 = por %p55, %p56
    %p58 = scmp.ne.s32.totalorder %s47, %s48
    %p59 = scmp.eq.s32.totalorder %s13, 0
    %p60 = por %p58, %p59
    %p61 = scmp.ne.s32.totalorder %s47, %s48
    %p62 = scmp.eq.s32.totalorder %s14, 1
    %p63 = por %p61, %p62
    %p65 = scmp.ne.s32.totalorder %s48, %s64
    %p66 = scmp.eq.s32.totalorder %s14, 0
    %p67 = por %p65, %p66
    %s68 = ssub.s32 %s8, %s15
    %p69 = scmp.eq.s32.totalorder %s68, 0
    %s71 = sadd.s32 %s70, 1
    %s72 = scalar_select %p69, %s70, %s71
    %p75 = pneg %p69
    %p76 = scmp.eq.s32.totalorder %s8, 1
    %p77 = por %p75, %p76
    %p78 = scmp.ne.s32.totalorder %s70, %s73
    %p79 = scmp.eq.s32.totalorder %s8, 0
    %p80 = por %p78, %p79
    %p81 = scmp.ne.s32.totalorder %s70, %s73
    %p82 = scmp.eq.s32.totalorder %s13, 1
    %p83 = por %p81, %p82
    %p84 = scmp.ne.s32.totalorder %s73, %s74
    %p85 = scmp.eq.s32.totalorder %s13, 0
    %p86 = por %p84, %p85
    %p87 = scmp.ne.s32.totalorder %s73, %s74
    %p88 = scmp.eq.s32.totalorder %s14, 1
    %p89 = por %p87, %p88
    %p91 = scmp.ne.s32.totalorder %s74, %s90
    %p92 = scmp.eq.s32.totalorder %s14, 0
    %p93 = por %p91, %p92
    %p94 = scmp.le.s32.totalorder 1, %s8
    %p95 = scmp.lt.s32.totalorder %s8, 3
    %p96 = pnand %p94, %p95
    %p97 = pneg %p96
    // Predicated region
    $region9: #{tpu_custom_call.1} parent=5 // pred_check
      _
    $region10: #{tpu_custom_call.1} parent=5 // pred_check_branch
      %99 = sbr.rel (%p96) target = $region12
    $region11: #{tpu_custom_call.1} parent=5 // pred_region
      %s100 = ssub.s32 %s8, 1
    $region12: #{tpu_custom_call.1} parent=5 // pred_fallthru
      _
    %p101 = scmp.lt.s32.totalorder %s8, 2
    // Predicated region
    $region13: #{tpu_custom_call.1} parent=5 // pred_check
      %p102 = pneg %p101
    $region14: #{tpu_custom_call.1} parent=5 // pred_check_branch
      %104 = sbr.rel (%p102) target = $region16
    $region15: #{tpu_custom_call.1} parent=5 // pred_region
      // Predicated region
      $region17: #{tpu_custom_call.1} parent=15 // pred_check
        %p105 = pneg %p28
      $region18: #{tpu_custom_call.1} parent=15 // pred_check_branch
        %107 = sbr.rel (%p105) target = $region20
      $region19: #{tpu_custom_call.1} parent=15 // pred_region
        %p108 = scmp.lt.s32.totalorder %s8, 1
        %s109 = scalar_select %p108, %s8, 1
        %s110 = smul.addr %s109, 8
        %s111 = scalar_lea.vmem %s0, %s110
      $region20: #{tpu_custom_call.1} parent=15 // pred_fallthru
        _
      // Predicated region
      $region21: #{tpu_custom_call.1} parent=15 // pred_check
        %p112 = pneg %p54
      $region22: #{tpu_custom_call.1} parent=15 // pred_check_branch
        %114 = sbr.rel (%p112) target = $region24
      $region23: #{tpu_custom_call.1} parent=15 // pred_region
        %p115 = scmp.lt.s32.totalorder %s8, 1
        %s116 = scalar_select %p115, %s8, 1
        %s117 = smul.addr %s116, 8
        %s118 = scalar_lea.vmem %s1, %s117
      $region24: #{tpu_custom_call.1} parent=15 // pred_fallthru
        _
    $region16: #{tpu_custom_call.1} parent=5 // pred_fallthru
      _
    %p119 = scmp.le.s32.totalorder 1, %s8
    %p120 = scmp.lt.s32.totalorder %s8, 3
    %p121 = pnand %p119, %p120
    %p122 = pneg %p121
    // Predicated region
    $region25: #{tpu_custom_call.1} parent=5 // pred_check
      _
    $region26: #{tpu_custom_call.1} parent=5 // pred_check_branch
      %124 = sbr.rel (%p121) target = $region28
    $region27: #{tpu_custom_call.1} parent=5 // pred_region
      %s125 = ssub.s32 %s8, 1
      %p126 = scmp.lt.s32.totalorder %s13, 1
      %s127 = scalar_select %p126, %s13, 1
      %s128 = smul.addr %s127, 8
      %s129 = scalar_lea.vmem %s0, %s128
      %p130 = pneg %p34
      %p131 = pneg %p31
      %p132 = scmp.lt.s32.totalorder %s13, 1
      %s133 = scalar_select %p132, %s13, 1
      %s134 = smul.addr %s133, 8
      %s135 = scalar_lea.vmem %s1, %s134
      %p136 = pneg %p60
      %p137 = pneg %p57
      %p138 = pneg %p86
      %p139 = pneg %p83
      %p140 = scmp.lt.s32.totalorder %s13, 1
      %s141 = scalar_select %p140, %s13, 1
      %s142 = smul.addr %s141, 8
      %s143 = scalar_lea.vmem %s2, %s142
      %p144 = scmp.lt.s32.totalorder %s13, 1
      %s145 = scalar_select %p144, %s13, 1
      %s146 = smul.addr %s145, 8
      %s147 = scalar_lea.vmem %s0, %s146
      %p148 = scmp.lt.s32.totalorder %s13, 1
      %s149 = scalar_select %p148, %s13, 1
      %s150 = smul.addr %s149, 8
      %s151 = scalar_lea.vmem %s1, %s150
      %p152 = scmp.lt.s32.totalorder %s13, 1
      %s153 = scalar_select %p152, %s13, 1
      %s154 = smul.addr %s153, 8
      %s155 = scalar_lea.vmem %s2, %s154
      %v156 = vld [vmem:[%s147] sm:$0xff]
      %v157 = vld [vmem:[%s151] sm:$0xff]
      %vm158 = vcmask 261120
      %v159 = vsel %vm158, %v156, -inf
      %160 = vmax.xlane.f32.xlu0 %v159
      %v161 = vpop.xlane.xlu0 %160
      %v162 = vsub.f32 %v156, %v161
      %v163 = vmul.f32 %v162, 1.442695
      %v164 = vpow.pop %v163
      %v165 = vsel %vm158, %v164, 0.0
      %166 = vadd.xlane.f32.xlu0 %v165
      %v167 = vpop.xlane.xlu0 %166
      %v168 = vlog2.pop %v167
      %v169 = vmul.f32 %v168, 0.6931472
      %v170 = vadd.f32 %v169, %v161
      %v171 = vlaneseq
      %v172 = vand.u32 %v171, 127
      %173 = vset.pattern.permute.xlu0 0
      %174 = vperm.xlu0 %173, %v157
      %v175 = vpop.permute.xlu0 %174
      %vm176 = vcmp.eq.s32.totalorder %v172, %v175
      %v177 = vsel %vm176, %v156, 0.0
      %v178 = vsel %vm158, %v177, 0.0
      %179 = vadd.xlane.f32.xlu0 %v178
      %v180 = vpop.xlane.xlu0 %179
      %s181 = smul.u32 %s13, 8
      %v182 = vlaneseq
      %v183 = vshrl.u32 %v182, 7
      %v184 = vstv %s181
      %v185 = vadd.s32 %v184, %v183
      %vm186 = vcmp.lt.s32.totalorder %v185, 10
      %vm187 = vcmp.ge.s32.totalorder %v157, 0
      %vm188 = vmand %vm186, %vm187
      %v189 = vsub.f32 %v170, %v180
      %v190 = vsel %vm188, %v189, 0.0
      %vm191 = vcmask 7168
      %192 = vst.msk [vmem:[%s155] sm:$0xff] %vm191, %v190
      %p193 = scmp.lt.s32.totalorder %s13, 1
      %s194 = scalar_select %p193, %s13, 1
      %s195 = smul.addr %s194, 8
      %s196 = scalar_lea.vmem %s2, %s195
      // Predicated region
      $region29: #{tpu_custom_call.1} parent=27 // pred_check
        %p197 = pneg %p83
      $region30: #{tpu_custom_call.1} parent=27 // pred_check_branch
        %199 = sbr.rel (%p197) target = $region32
      $region31: #{tpu_custom_call.1} parent=27 // pred_region
        _
      $region32: #{tpu_custom_call.1} parent=27 // pred_fallthru
        _
    $region28: #{tpu_custom_call.1} parent=5 // pred_fallthru
      _
    %p200 = scmp.le.s32.totalorder 2, %s8
    // Predicated region
    $region33: #{tpu_custom_call.1} parent=5 // pred_check
      %p201 = pneg %p200
    $region34: #{tpu_custom_call.1} parent=5 // pred_check_branch
      %203 = sbr.rel (%p201) target = $region36
    $region35: #{tpu_custom_call.1} parent=5 // pred_region
      %s204 = ssub.s32 %s8, 2
      // Predicated region
      $region37: #{tpu_custom_call.1} parent=35 // pred_check
        %p205 = pneg %p89
      $region38: #{tpu_custom_call.1} parent=35 // pred_check_branch
        %207 = sbr.rel (%p205) target = $region40
      $region39: #{tpu_custom_call.1} parent=35 // pred_region
        %p208 = scmp.lt.s32.totalorder %s14, 1
        %s209 = scalar_select %p208, %s14, 1
        %s210 = smul.addr %s209, 8
        %s211 = scalar_lea.vmem %s2, %s210
      $region40: #{tpu_custom_call.1} parent=35 // pred_fallthru
        _
    $region36: #{tpu_custom_call.1} parent=5 // pred_fallthru
      _
  $region6: #{tpu_custom_call.1} parent=0 // loop_footer
    %s12 = sadd.s32 1, %s8
  $region7: #{tpu_custom_call.1} parent=0 // loop_footer_branch
    %7 = sbr.rel target = $region3
  $region8: #{tpu_custom_call.1} parent=0 // loop_exit
    _

</llo_original>
